<compile_context>
chip_gen: v5e
topology: v5e:2x2
jax: 0.10.0
libtpu: 0.0.40
codegen_flags: <defaults>
</compile_context>

<pallas_src>
import functools
import math

import jax
import jax.numpy as jnp
from jax.experimental import pallas as pl
from jax.experimental.pallas import tpu as pltpu

_VMEM_LIMIT = 32 * 1024 * 1024   # = v6e/v7x scoped default, bumps v5e's 16 MiB
_LN_EPS = 1e-12


# ----------------------------------------------------------------------------
# helpers
# ----------------------------------------------------------------------------
def _sublane_align(dtype):
    """Minimum second-minor tile for a dtype (8 f32 / 16 bf16 / 32 int8)."""
    return {4: 8, 2: 16, 1: 32}.get(jnp.dtype(dtype).itemsize, 8)


def _pick_tile(dim, pref, align):
    """Largest aligned divisor of `dim` <= pref; else the smallest aligned
    divisor above pref (caps the VMEM footprint); else the full dimension."""
    if dim <= pref:
        return dim
    t = (pref // align) * align
    while t >= align:
        if dim % t == 0:
            return t
        t -= align
    t = ((pref + align - 1) // align) * align
    while t < dim:
        if dim % t == 0:
            return t
        t += align
    return dim


def _heads_per_group(num_heads, head_dim):
    """Smallest head-group whose fused width is lane-dense (multiple of 128)."""
    g = 1
    while g <= num_heads:
        if num_heads % g == 0 and (g * head_dim) % 128 == 0:
            return g
        g += 1
    return num_heads


def _erf_approx(x):
    """Abramowitz & Stegun 7.1.26 erf, |err| < 1.5e-7 (exp runs on the EUP).
    Used instead of lax.erf inside kernels to avoid relying on its Mosaic
    lowering; accuracy is far inside the model tolerance."""
    sign = jnp.where(x < 0.0, -1.0, 1.0)
    a = jnp.abs(x)
    t = 1.0 / (1.0 + 0.3275911 * a)
    poly = t * (0.254829592 + t * (-0.284496736 + t * (1.421413741
               + t * (-1.453152027 + t * 1.061405429))))
    return sign * (1.0 - poly * jnp.exp(-a * a))


def _gelu_exact(x):
    # erf-based GELU (matches torch / HF "gelu"), not the tanh approximation.
    return 0.5 * x * (1.0 + _erf_approx(x * 0.7071067811865476))


# ----------------------------------------------------------------------------
# kernel 1: tiled GEMM + bias (+ optional fused GELU epilogue)
# ----------------------------------------------------------------------------
def _dense_kernel(x_ref, w_ref, b_ref, o_ref, acc_ref, *, activation):
    k = pl.program_id(2)

    @pl.when(k == 0)
    def _():
        acc_ref[...] = jnp.zeros_like(acc_ref)

    acc_ref[...] += jnp.dot(x_ref[...], w_ref[...],
                            preferred_element_type=jnp.float32)

    @pl.when(k == pl.num_programs(2) - 1)
    def _():
        y = acc_ref[...] + b_ref[...].astype(jnp.float32)
        if activation == "gelu":
            y = _gelu_exact(y)
        o_ref[...] = y.astype(o_ref.dtype)


def dense(x, lin, activation=None):
    wt, b = lin["wt"], lin["b"]            # wt (K, N), pre-transposed once
    M, K = x.shape
    N = wt.shape[1]
    tm = _pick_tile(M, 512, _sublane_align(x.dtype))
    tn = _pick_tile(N, 512, 128)
    tk = _pick_tile(K, 512, 128)
    itemsize = jnp.dtype(x.dtype).itemsize
    cost = pl.CostEstimate(
        flops=2 * M * N * K,
        transcendentals=M * N if activation == "gelu" else 0,
        bytes_accessed=(M * K + K * N + M * N + N) * itemsize)
    return pl.pallas_call(
        functools.partial(_dense_kernel, activation=activation),
        out_shape=jax.ShapeDtypeStruct((M, N), x.dtype),
        grid=(M // tm, N // tn, K // tk),
        in_specs=[pl.BlockSpec((tm, tk), lambda i, j, k: (i, k)),
                  pl.BlockSpec((tk, tn), lambda i, j, k: (k, j)),
                  pl.BlockSpec((1, tn), lambda i, j, k: (0, j))],
        out_specs=pl.BlockSpec((tm, tn), lambda i, j, k: (i, j)),
        scratch_shapes=[pltpu.VMEM((tm, tn), jnp.float32)],
        compiler_params=pltpu.CompilerParams(
            dimension_semantics=("parallel", "parallel", "arbitrary"),
            vmem_limit_bytes=_VMEM_LIMIT),
        cost_estimate=cost,
    )(x, wt, b.reshape(1, N))


# ----------------------------------------------------------------------------
# kernel 2: tiled GEMM + bias + residual add + LayerNorm fused in the epilogue
# (full output row resident: tn == N == hidden size)
# ----------------------------------------------------------------------------
def _dense_res_ln_kernel(x_ref, w_ref, b_ref, r_ref, g_ref, beta_ref, o_ref,
                         acc_ref, *, eps):
    k = pl.program_id(1)

    @pl.when(k == 0)
    def _():
        acc_ref[...] = jnp.zeros_like(acc_ref)

    acc_ref[...] += jnp.dot(x_ref[...], w_ref[...],
                            preferred_element_type=jnp.float32)

    @pl.when(k == pl.num_programs(1) - 1)
    def _():
        y = (acc_ref[...] + b_ref[...].astype(jnp.float32)
             + r_ref[...].astype(jnp.float32))
        mu = jnp.mean(y, axis=-1, keepdims=True)
        yc = y - mu
        var = jnp.mean(yc * yc, axis=-1, keepdims=True)
        y = yc * jax.lax.rsqrt(var + eps)
        y = y * g_ref[...].astype(jnp.float32) + beta_ref[...].astype(jnp.float32)
        o_ref[...] = y.astype(o_ref.dtype)


def dense_res_ln(x, lin, residual, ln, eps=_LN_EPS):
    wt, b = lin["wt"], lin["b"]
    M, K = x.shape
    N = wt.shape[1]
    tm = _pick_tile(M, 512, _sublane_align(x.dtype))
    tk = _pick_tile(K, 512, 128)
    itemsize = jnp.dtype(x.dtype).itemsize
    cost = pl.CostEstimate(
        flops=2 * M * N * K + 8 * M * N,
        transcendentals=M,                       # rsqrt per row
        bytes_accessed=(M * K + K * N + 2 * M * N + 3 * N) * itemsize)
    return pl.pallas_call(
        functools.partial(_dense_res_ln_kernel, eps=eps),
        out_shape=jax.ShapeDtypeStruct((M, N), x.dtype),
        grid=(M // tm, K // tk),
        in_specs=[pl.BlockSpec((tm, tk), lambda i, k: (i, k)),
                  pl.BlockSpec((tk, N), lambda i, k: (k, 0)),
                  pl.BlockSpec((1, N), lambda i, k: (0, 0)),
                  pl.BlockSpec((tm, N), lambda i, k: (i, 0)),
                  pl.BlockSpec((1, N), lambda i, k: (0, 0)),
                  pl.BlockSpec((1, N), lambda i, k: (0, 0))],
        out_specs=pl.BlockSpec((tm, N), lambda i, k: (i, 0)),
        scratch_shapes=[pltpu.VMEM((tm, N), jnp.float32)],
        compiler_params=pltpu.CompilerParams(
            dimension_semantics=("parallel", "arbitrary"),
            vmem_limit_bytes=_VMEM_LIMIT),
        cost_estimate=cost,
    )(x, wt, b.reshape(1, N), residual, ln["gamma"].reshape(1, N),
      ln["beta"].reshape(1, N))


# ----------------------------------------------------------------------------
# kernel 3: fused attention over a lane-dense head group, (B, S, H) layout
# (optionally + SourceAttendsSubthread scores)
# ----------------------------------------------------------------------------
def _attn_body(mask_ref, q_ref, k_ref, v_ref, q2_ref, k2_ref, o_ref, *,
               heads, head_dim, scale):
    m = mask_ref[0].astype(jnp.float32)            # (1,S) or (S,S): broadcasts
    parts = []
    for h in range(heads):
        lo, hi = h * head_dim, (h + 1) * head_dim
        q = q_ref[0, :, lo:hi]
        k = k_ref[0, :, lo:hi]
        v = v_ref[0, :, lo:hi]
        # q @ k^T on the MXU, contracting the head dim (no materialized .T).
        s = jax.lax.dot_general(q, k, (((1,), (1,)), ((), ())),
                                preferred_element_type=jnp.float32)
        if q2_ref is not None:
            q2 = q2_ref[0, :, lo:hi]
            k2 = k2_ref[0, :, lo:hi]
            s = s + jax.lax.dot_general(q2, k2, (((1,), (1,)), ((), ())),
                                        preferred_element_type=jnp.float32)
        s = s * scale + m                          # single scale after the sum
        s = s - jnp.max(s, axis=-1, keepdims=True)
        p = jnp.exp(s)
        inv = pl.reciprocal(jnp.sum(p, axis=-1, keepdims=True), approx=True)
        ctx = jnp.dot(p.astype(v.dtype), v,
                      preferred_element_type=jnp.float32) * inv
        parts.append(ctx)
    out = parts[0] if heads == 1 else jnp.concatenate(parts, axis=-1)
    o_ref[0] = out.astype(o_ref.dtype)             # one lane-dense store


def _mha_kernel(mask_ref, q_ref, k_ref, v_ref, o_ref, *, heads, head_dim, scale):
    _attn_body(mask_ref, q_ref, k_ref, v_ref, None, None, o_ref,
               heads=heads, head_dim=head_dim, scale=scale)


def _mha_src_kernel(mask_ref, q_ref, k_ref, v_ref, q2_ref, k2_ref, o_ref, *,
                    heads, head_dim, scale):
    _attn_body(mask_ref, q_ref, k_ref, v_ref, q2_ref, k2_ref, o_ref,
               heads=heads, head_dim=head_dim, scale=scale)


def mha(mask, qkv, num_heads, head_dim, scale, src_k=None):
    """qkv: (B, S, 3H) (or (B, S, 4H) with the src_q projection appended).
    Output: (B, S, H) with heads already merged (no transpose needed)."""
    B, S, _ = qkv.shape
    H = num_heads * head_dim
    has_src = src_k is not None
    if has_src:
        assert src_k.shape[1] == S, "source length must equal subthread length"

    G = _heads_per_group(num_heads, head_dim)
    gd = G * head_dim
    nG = num_heads // G
    grouped = (gd % 128 == 0)
    if grouped:
        # Lane-dense head groups are read straight out of the fused QKV(Q2)
        # GEMM output via column-block index_maps: no host-side head split.
        q_in = k_in = v_in = q2_in = qkv
        q_map = lambda b, g: (b, 0, g)
        k_map = lambda b, g: (b, 0, nG + g)
        v_map = lambda b, g: (b, 0, 2 * nG + g)
        q2_map = lambda b, g: (b, 0, 3 * nG + g)
    else:
        # Small / odd head widths: slice once in XLA so every Pallas block
        # covers a full (legal) last dimension.
        G, nG, gd = num_heads, 1, H
        q_in = jax.lax.slice_in_dim(qkv, 0, H, axis=2)
        k_in = jax.lax.slice_in_dim(qkv, H, 2 * H, axis=2)
        v_in = jax.lax.slice_in_dim(qkv, 2 * H, 3 * H, axis=2)
        q2_in = (jax.lax.slice_in_dim(qkv, 3 * H, 4 * H, axis=2)
                 if has_src else None)
        q_map = k_map = v_map = q2_map = lambda b, g: (b, 0, g)

    Mq = mask.shape[1]                         # 1 (key-only) or S (per-query)
    blk = (1, S, gd)
    in_specs = [pl.BlockSpec((1, Mq, S), lambda b, g: (b, 0, 0)),
                pl.BlockSpec(blk, q_map),
                pl.BlockSpec(blk, k_map),
                pl.BlockSpec(blk, v_map)]
    args = [mask, q_in, k_in, v_in]
    if has_src:
        in_specs += [pl.BlockSpec(blk, q2_map),
                     pl.BlockSpec((1, S, gd), lambda b, g: (b, 0, g))]
        args += [q2_in, src_k]

    kernel = functools.partial(_mha_src_kernel if has_src else _mha_kernel,
                               heads=G, head_dim=head_dim, scale=scale)
    itemsize = jnp.dtype(qkv.dtype).itemsize
    n_score = 2 if has_src else 1
    cost = pl.CostEstimate(
        flops=2 * B * num_heads * S * S * head_dim * (n_score + 1),
        transcendentals=B * num_heads * S * (S + 1),
        bytes_accessed=(B * S * H * (4 + 2 * (n_score - 1))
                        + B * Mq * S) * itemsize)

    # TODO(synk): KV-blocked (online-softmax) variant once S is large enough
    # that the (S, S) f32 score tile threatens v7x's 64 MiB VMEM.
    return pl.pallas_call(
        kernel,
        out_shape=jax.ShapeDtypeStruct((B, S, H), qkv.dtype),
        grid=(B, nG),
        in_specs=in_specs,
        out_specs=pl.BlockSpec(blk, lambda b, g: (b, 0, g)),
        compiler_params=pltpu.CompilerParams(
            dimension_semantics=("parallel", "parallel"),
            vmem_limit_bytes=_VMEM_LIMIT),
        cost_estimate=cost,
    )(*args)


# ----------------------------------------------------------------------------
# model composition (BertLayer / MyBertLayer / MyBertEncoder)
# ----------------------------------------------------------------------------
def _self_attention(x, mask, p, num_heads, src=None):
    B, S, H = x.shape
    head_dim = H // num_heads
    scale = 1.0 / math.sqrt(head_dim)
    x2 = x.reshape(B * S, H)
    qkv = dense(x2, p["qkv"]).reshape(B, S, -1)      # fused Q|K|V(|src_Q) GEMM
    if src is None:
        return mha(mask, qkv, num_heads, head_dim, scale)
    Bs, Ss, Hs = src.shape
    k2 = dense(src.reshape(Bs * Ss, Hs), p["src_k"]).reshape(Bs, Ss, H)
    return mha(mask, qkv, num_heads, head_dim, scale, src_k=k2)


def _bert_layer(x, mask, p, num_heads, src=None):
    B, S, H = x.shape
    x2 = x.reshape(B * S, H)
    ctx = _self_attention(x, mask, p, num_heads, src).reshape(B * S, H)
    attn_out = dense_res_ln(ctx, p["attn_out"], x2, p["attn_ln"])
    inter = dense(attn_out, p["inter"], activation="gelu")
    y = dense_res_ln(inter, p["out"], attn_out, p["out_ln"])
    return y.reshape(B, S, H)


def _normalize_mask(attention_mask, B, S, dtype):
    if attention_mask is None:
        return jnp.zeros((B, 1, S), dtype)
    m = jnp.asarray(attention_mask, dtype)
    if m.ndim == 4:            # HF extended (B,1,1,S) or per-query (B,1,S,S)
        m = m.reshape(B, m.shape[2], m.shape[3])
    elif m.ndim == 2:          # (B, S) additive
        m = m.reshape(B, 1, S)
    assert m.shape[0] == B and m.shape[-1] == S and m.shape[1] in (1, S)
    return m


def my_bert_encoder(hidden_states, attention_mask, params, num_heads,
                    head_mask=None, source_embedding=None,
                    output_all_encoded_layers=True):
    # Inference semantics: dropout = identity.
    if head_mask is not None:
        # TODO(synk): head_mask / cross-attention / past_key_values of the
        # BertLayer half are unused by this forward and not implemented.
        raise NotImplementedError("head_mask is not supported")
    B, S, H = hidden_states.shape
    mask = _normalize_mask(attention_mask, B, S, hidden_states.dtype)
    n_bert = len(params) // 2
    all_layers = []
    h = hidden_states
    for li, p in enumerate(params):
        src = source_embedding if li >= n_bert else None   # MyBertLayer half
        h = _bert_layer(h, mask, p, num_heads, src)
        if output_all_encoded_layers:
            all_layers.append(h)
    if not output_all_encoded_layers:
        all_layers.append(h)
    return all_layers


# ----------------------------------------------------------------------------
# parameter construction: torch-layout init + one-time kernel-friendly prep
# ----------------------------------------------------------------------------
def _init_linear_torch(key, in_f, out_f):
    kw, kb = jax.random.split(key)
    return {"w": 0.02 * jax.random.normal(kw, (out_f, in_f), jnp.float32),
            "b": 0.02 * jax.random.normal(kb, (out_f,), jnp.float32)}


def _init_layernorm(key, h):
    kg, kb = jax.random.split(key)
    return {"gamma": 1.0 + 0.1 * jax.random.normal(kg, (h,), jnp.float32),
            "beta": 0.1 * jax.random.normal(kb, (h,), jnp.float32)}


def init_torch_params(key, H, nH, I, num_layers):
    n_bert = num_layers // 2
    layers = []
    for li in range(num_layers):
        key, *ks = jax.random.split(key, 12)
        p = {"q": _init_linear_torch(ks[0], H, H),
             "k": _init_linear_torch(ks[1], H, H),
             "v": _init_linear_torch(ks[2], H, H),
             "attn_out": _init_linear_torch(ks[3], H, H),
             "attn_ln": _init_layernorm(ks[4], H),
             "inter": _init_linear_torch(ks[5], H, I),
             "out": _init_linear_torch(ks[6], I, H),
             "out_ln": _init_layernorm(ks[7], H)}
        if li >= n_bert:       # MyBertLayer: SourceAttendsSubthread query/key
            p["src_q"] = _init_linear_torch(ks[8], H, H)
            p["src_k"] = _init_linear_torch(ks[9], H, H)
        layers.append(p)
    return layers


def prepare_params(torch_params, dtype=jnp.float32):
    """One-time prep: transpose torch (out,in) -> (in,out) and fuse the
    Q|K|V(|src_Q) projections into one wide GEMM.  Pass dtype=jnp.bfloat16 to
    run the whole encoder on the bf16 MXU path (kernels never up-cast)."""
    prepped = []
    for p in torch_params:
        mats = [p["q"], p["k"], p["v"]] + ([p["src_q"]] if "src_q" in p else [])
        kp = {
            "qkv": {"wt": jnp.concatenate([m["w"].T for m in mats],
                                          axis=1).astype(dtype),
                    "b": jnp.concatenate([m["b"] for m in mats]).astype(dtype)},
            "attn_out": {"wt": p["attn_out"]["w"].T.astype(dtype),
                         "b": p["attn_out"]["b"].astype(dtype)},
            "attn_ln": {"gamma": p["attn_ln"]["gamma"].astype(dtype),
                        "beta": p["attn_ln"]["beta"].astype(dtype)},
            "inter": {"wt": p["inter"]["w"].T.astype(dtype),
                      "b": p["inter"]["b"].astype(dtype)},
            "out": {"wt": p["out"]["w"].T.astype(dtype),
                    "b": p["out"]["b"].astype(dtype)},
            "out_ln": {"gamma": p["out_ln"]["gamma"].astype(dtype),
                       "beta": p["out_ln"]["beta"].astype(dtype)},
        }
        if "src_k" in p:
            kp["src_k"] = {"wt": p["src_k"]["w"].T.astype(dtype),
                           "b": p["src_k"]["b"].astype(dtype)}
        prepped.append(kp)
    return prepped


# ----------------------------------------------------------------------------
# pure-JAX reference (mirrors the PyTorch forward, inference mode)
# ----------------------------------------------------------------------------
def _linear_ref(x, p):
    return jnp.dot(x, p["w"].T, precision=jax.lax.Precision.HIGHEST) + p["b"]


def _ln_ref(x, ln, eps=_LN_EPS):
    mu = jnp.mean(x, axis=-1, keepdims=True)
    var = jnp.mean((x - mu) ** 2, axis=-1, keepdims=True)
    return (x - mu) * jax.lax.rsqrt(var + eps) * ln["gamma"] + ln["beta"]


def _layer_ref(x, mask4, p, nH, src=None):
    B, S, H = x.shape
    d = H // nH
    split = lambda t, s: t.reshape(B, s, nH, d).transpose(0, 2, 1, 3)
    q = split(_linear_ref(x, p["q"]), S)
    k = split(_linear_ref(x, p["k"]), S)
    v = split(_linear_ref(x, p["v"]), S)
    scores = jnp.einsum("bhqd,bhkd->bhqk", q, k,
                        precision=jax.lax.Precision.HIGHEST) / math.sqrt(d)
    if src is not None:
        q2 = split(_linear_ref(x, p["src_q"]), S)
        k2 = split(_linear_ref(src, p["src_k"]), src.shape[1])
        scores = scores + jnp.einsum(
            "bhqd,bhkd->bhqk", q2, k2,
            precision=jax.lax.Precision.HIGHEST) / math.sqrt(d)
    scores = scores + mask4
    probs = jax.nn.softmax(scores, axis=-1)
    ctx = jnp.einsum("bhqk,bhkd->bhqd", probs, v,
                     precision=jax.lax.Precision.HIGHEST)
    ctx = ctx.transpose(0, 2, 1, 3).reshape(B, S, H)
    attn_out = _ln_ref(_linear_ref(ctx, p["attn_out"]) + x, p["attn_ln"])
    inter = jax.nn.gelu(_linear_ref(attn_out, p["inter"]), approximate=False)
    return _ln_ref(_linear_ref(inter, p["out"]) + attn_out, p["out_ln"])


def encoder_ref(hidden, mask4, torch_params, nH, src):
    n_bert = len(torch_params) // 2
    outs = []
    for li, p in enumerate(torch_params):
        hidden = _layer_ref(hidden, mask4, p, nH,
                            src if li >= n_bert else None)
        outs.append(hidden)
    return outs


# ----------------------------------------------------------------------------
def _run_config(name, key, B, S, H, nH, I, L):
    kp, kh, ks = jax.random.split(key, 3)
    tparams = init_torch_params(kp, H, nH, I, L)
    kparams = prepare_params(tparams)
    hidden = jax.random.normal(kh, (B, S, H), jnp.float32)
    source = jax.random.normal(ks, (B, S, H), jnp.float32)
    # standard extended additive mask (B,1,1,S); mask last 2 keys of last batch
    mask4 = jnp.zeros((B, 1, 1, S), jnp.float32)
    mask4 = mask4.at[B - 1, :, :, S - 2:].set(-10000.0)

    outs = my_bert_encoder(hidden, mask4, kparams, nH,
                           source_embedding=source,
                           output_all_encoded_layers=True)
    outs = jax.block_until_ready(outs)

    refs = encoder_ref(hidden, mask4, tparams, nH, source)
    assert len(outs) == L
    for o, r in zip(outs, refs):
        assert o.shape == (B, S, H)
        err = float(jnp.max(jnp.abs(o - r)))
        assert jnp.allclose(o, r, atol=2e-3, rtol=2e-3), (name, err)


if __name__ == "__main__":
    key = jax.random.PRNGKey(0)
    k1, k2 = jax.random.split(key)
    # tiny config (head_dim = 8 -> full-width fallback attention path)
    _run_config("small", k1, B=2, S=8, H=32, nH=4, I=64, L=2)
    # lane-dense config (head_dim = 64 -> grouped 128-wide attention blocks)
    _run_config("lane_dense", k2, B=2, S=16, H=128, nH=2, I=256, L=2)
    print("KERNEL_OK")
</pallas_src>

<mosaic_0001>
module attributes {stable_mosaic.version = 11 : i64} {
  func.func @_dense_kernel(%arg0: i32, %arg1: i32, %arg2: i32, %arg3: memref<16x32xf32, #tpu.memory_space<vmem>>, %arg4: memref<32x96xf32, #tpu.memory_space<vmem>>, %arg5: memref<1x96xf32, #tpu.memory_space<vmem>>, %arg6: memref<16x96xf32, #tpu.memory_space<vmem>>, %arg7: memref<16x96xf32, #tpu.memory_space<vmem>>) attributes {dimension_semantics = [#tpu.dimension_semantics<parallel>, #tpu.dimension_semantics<parallel>, #tpu.dimension_semantics<arbitrary>], iteration_bounds = array<i64: 1, 1, 1>, scalar_prefetch = 0 : i64, scratch_operands = 1 : i64, tpu.core_type = #tpu.core_type<tc>, window_params = [{transform_indices = @transform_0, window_bounds = array<i64: 16, 32>}, {transform_indices = @transform_1, window_bounds = array<i64: 32, 96>}, {transform_indices = @transform_2, window_bounds = array<i64: 1, 96>}, {transform_indices = @transform_3, window_bounds = array<i64: 16, 96>}]} {
    %c0_i32 = arith.constant 0 : i32
    %0 = arith.cmpi eq, %arg2, %c0_i32 : i32
    %1 = arith.extui %0 : i1 to i32
    %c0_i32_0 = arith.constant 0 : i32
    %2 = arith.cmpi ne, %1, %c0_i32_0 : i32
    scf.if %2 {
      %cst_10 = arith.constant 0.000000e+00 : f32
      %12 = vector.broadcast %cst_10 : f32 to vector<16x96xf32>
      %c0_11 = arith.constant 0 : index
      %c0_12 = arith.constant 0 : index
      %13 = vector.load %arg7[%c0_11, %c0_12] : memref<16x96xf32, #tpu.memory_space<vmem>>, vector<16x96xf32>
      tpu.vector_store %arg7[%c0_11, %c0_12], %12 {strides = array<i32>} : memref<16x96xf32, #tpu.memory_space<vmem>>, vector<16x96xf32>,
    } else {
    }
    %c0 = arith.constant 0 : index
    %c0_1 = arith.constant 0 : index
    %3 = vector.load %arg7[%c0, %c0_1] : memref<16x96xf32, #tpu.memory_space<vmem>>, vector<16x96xf32>
    %c0_2 = arith.constant 0 : index
    %c0_3 = arith.constant 0 : index
    %4 = vector.load %arg3[%c0_2, %c0_3] : memref<16x32xf32, #tpu.memory_space<vmem>>, vector<16x32xf32>
    %c0_4 = arith.constant 0 : index
    %c0_5 = arith.constant 0 : index
    %5 = vector.load %arg4[%c0_4, %c0_5] : memref<32x96xf32, #tpu.memory_space<vmem>>, vector<32x96xf32>
    %cst = arith.constant dense<0.000000e+00> : vector<16x96xf32>
    %6 = tpu.matmul %4, %5, %cst {dimension_numbers = #tpu.dot_dimension_numbers<[1], [0], [0], [1], [0, 0, 1, 1], [], []>} : vector<16x32xf32>, vector<32x96xf32>, vector<16x96xf32> -> vector<16x96xf32>
    %7 = arith.addf %3, %6 : vector<16x96xf32>
    %c0_6 = arith.constant 0 : index
    %c0_7 = arith.constant 0 : index
    %8 = vector.load %arg7[%c0_6, %c0_7] : memref<16x96xf32, #tpu.memory_space<vmem>>, vector<16x96xf32>
    tpu.vector_store %arg7[%c0_6, %c0_7], %7 {strides = array<i32>} : memref<16x96xf32, #tpu.memory_space<vmem>>, vector<16x96xf32>,
    %c0_i32_8 = arith.constant 0 : i32
    %9 = arith.cmpi eq, %arg2, %c0_i32_8 : i32
    %10 = arith.extui %9 : i1 to i32
    %c0_i32_9 = arith.constant 0 : i32
    %11 = arith.cmpi ne, %10, %c0_i32_9 : i32
    scf.if %11 {
      %c0_10 = arith.constant 0 : index
      %c0_11 = arith.constant 0 : index
      %12 = vector.load %arg7[%c0_10, %c0_11] : memref<16x96xf32, #tpu.memory_space<vmem>>, vector<16x96xf32>
      %c0_12 = arith.constant 0 : index
      %c0_13 = arith.constant 0 : index
      %13 = vector.load %arg5[%c0_12, %c0_13] : memref<1x96xf32, #tpu.memory_space<vmem>>, vector<1x96xf32>
      %14 = vector.broadcast %13 : vector<1x96xf32> to vector<16x96xf32>
      %15 = arith.addf %12, %14 : vector<16x96xf32>
      %c0_14 = arith.constant 0 : index
      %c0_15 = arith.constant 0 : index
      %16 = vector.load %arg6[%c0_14, %c0_15] : memref<16x96xf32, #tpu.memory_space<vmem>>, vector<16x96xf32>
      tpu.vector_store %arg6[%c0_14, %c0_15], %15 {strides = array<i32>} : memref<16x96xf32, #tpu.memory_space<vmem>>, vector<16x96xf32>,
    } else {
    }
    return
  }
  func.func @transform_0(%arg0: i32, %arg1: i32, %arg2: i32) -> (i32, i32) {
    %c0_i32 = arith.constant 0 : i32
    return %arg0, %arg2 : i32, i32
  }
  func.func @transform_1(%arg0: i32, %arg1: i32, %arg2: i32) -> (i32, i32) {
    %c0_i32 = arith.constant 0 : i32
    return %arg2, %arg1 : i32, i32
  }
  func.func @transform_2(%arg0: i32, %arg1: i32, %arg2: i32) -> (i32, i32) {
    %c0_i32 = arith.constant 0 : i32
    %c0_i32_0 = arith.constant 0 : i32
    return %c0_i32, %arg1 : i32, i32
  }
  func.func @transform_3(%arg0: i32, %arg1: i32, %arg2: i32) -> (i32, i32) {
    %c0_i32 = arith.constant 0 : i32
    return %arg0, %arg1 : i32, i32
  }
}

</mosaic_0001>

<llo_original>
// kernel: tpu_custom_call.1
$region0: #{tpu_custom_call.1}
  #allocation0 [shape = 'u32[]', space=smem, size = 0x4, offset = 0x4, fixed_abs, tag = 'smem constant byte address 0x4 - core index']
  #allocation1 [shape = 'u32[72,128]{1,0:T(1,128)}', space=vmem, size = 0x9000, scoped, tag = 'internal scratch']
  #allocation2 [shape = 'f32[16,96]{1,0:T(8,128)}', space=vmem, size = 0x2000, scoped, tag = 'scratch operand']
  %s0 = inlined_call_operand.hbm [shape: f32[16,32], index: 0, kind: input, shape index: {}]
  %s1 = inlined_call_operand.hbm [shape: f32[32,96], index: 1, kind: input, shape index: {}]
  %s2 = inlined_call_operand.vmem [shape: f32[1,96], index: 2, kind: input, shape index: {}]
  %s3 = inlined_call_operand.hbm [shape: f32[16,96], index: 3, kind: output, shape index: {}]
  %s4 = sld [smem:[#allocation0]]
  $region38: #{tpu_custom_call.1} parent=0
    _
  %s6 = ssub.s32 1, %s4
  %s7 = scalar_select 0, %s6, %s4
  $region1: #{tpu_custom_call.1} parent=0
    #allocation3 [shape = 'u8[8192]{0}', space=vmem, size = 0x2000, scoped, tag = 'input window, operand 0, single buffered']
    #allocation4 [shape = 's32[1]{0}', space=sflag, size = 0x4, scoped, tag = 'scoped memory for tpu_custom_call.1']
    #allocation5 [shape = 's32[1]{0}', space=sflag, size = 0x4, scoped, tag = 'scoped memory for tpu_custom_call.1']
    #allocation6 [shape = 'u8[16384]{0}', space=vmem, size = 0x4000, scoped, tag = 'input window, operand 1, single buffered']
    #allocation7 [shape = 's32[1]{0}', space=sflag, size = 0x4, scoped, tag = 'scoped memory for tpu_custom_call.1']
    #allocation8 [shape = 'u8[8192]{0}', space=vmem, size = 0x2000, scoped, tag = 'output window, operand 0, single buffered']
    %8 = vsyncpa [#allocation4], 0
    %9 = vsyncpa [#allocation7], 0
    %10 = vsyncpa [#allocation5], 0
    // Predicated region
    $region2: #{tpu_custom_call.1} parent=1 // pred_check
      _
    $region3: #{tpu_custom_call.1} parent=1 // pred_check_branch
      %12 = sbr.rel (0) target = $region5
    $region4: #{tpu_custom_call.1} parent=1 // pred_region
      %14 = vsyncadd [#allocation4], 0
      %s15 = sshll.u32 %s0, 4
      %s16 = int_to_ptr.hbm [resolvable:$true] %s15
      %s17 = sshll.u32 [#allocation3], 4
      %s18 = int_to_ptr.vmem [resolvable:$true] %s17
      %23 = dma.hbm_to_vmem [thread:$0]  %s16, 256, %s18, [#allocation4], 128, 128, 8
    $region5: #{tpu_custom_call.1} parent=1 // pred_fallthru
      _
    // Predicated region
    $region6: #{tpu_custom_call.1} parent=1 // pred_check
      _
    $region7: #{tpu_custom_call.1} parent=1 // pred_check_branch
      %25 = sbr.rel (0) target = $region9
    $region8: #{tpu_custom_call.1} parent=1 // pred_region
      %27 = vsyncadd [#allocation7], 0
      %s28 = sshll.u32 %s1, 4
      %s29 = int_to_ptr.hbm [resolvable:$true] %s28
      %s30 = sshll.u32 [#allocation6], 4
      %s31 = int_to_ptr.vmem [resolvable:$true] %s30
      %36 = dma.hbm_to_vmem [thread:$0]  %s29, 512, %s31, [#allocation7], 128, 128, 8
    $region9: #{tpu_custom_call.1} parent=1 // pred_fallthru
      _
    // Predicated region
    $region10: #{tpu_custom_call.1} parent=1 // pred_check
      _
    $region11: #{tpu_custom_call.1} parent=1 // pred_check_branch
      %38 = sbr.rel (0) target = $region13
    $region12: #{tpu_custom_call.1} parent=1 // pred_region
      _
    $region13: #{tpu_custom_call.1} parent=1 // pred_fallthru
      _
    // Predicated region
    $region14: #{tpu_custom_call.1} parent=1 // pred_check
      _
    $region15: #{tpu_custom_call.1} parent=1 // pred_check_branch
      %40 = sbr.rel (0) target = $region17
    $region16: #{tpu_custom_call.1} parent=1 // pred_region
      %42 = dma.done [#allocation4], 256
    $region17: #{tpu_custom_call.1} parent=1 // pred_fallthru
      _
    // Predicated region
    $region18: #{tpu_custom_call.1} parent=1 // pred_check
      _
    $region19: #{tpu_custom_call.1} parent=1 // pred_check_branch
      %44 = sbr.rel (0) target = $region21
    $region20: #{tpu_custom_call.1} parent=1 // pred_region
      %46 = dma.done [#allocation7], 512
    $region21: #{tpu_custom_call.1} parent=1 // pred_fallthru
      _
    %p47 = scmp.eq.s32.totalorder 0, 0
    // Predicated region
    $region22: #{tpu_custom_call.1} parent=1 // pred_check
      %p48 = pneg %p47
    $region23: #{tpu_custom_call.1} parent=1 // pred_check_branch
      %50 = sbr.rel (%p48) target = $region25
    $region24: #{tpu_custom_call.1} parent=1 // pred_region
      %vm51 = vcmask 785408
      %52 = vst.msk [vmem:[#allocation2] sm:$0xff] %vm51, 0.0
      %53 = vst.msk [vmem:[#allocation2 + $0x8] sm:$0xff] %vm51, 0.0
    $region25: #{tpu_custom_call.1} parent=1 // pred_fallthru
      _
    %v54 = vld [vmem:[#allocation2] sm:$0xff]
    %v55 = vld [vmem:[#allocation2 + $0x8] sm:$0xff]
    %v56 = vld [vmem:[#allocation3] sm:$0xff]
    %v57 = vld [vmem:[#allocation3 + $0x8] sm:$0xff]
    %v58 = vld [vmem:[#allocation6] sm:$0xff]
    %v59 = vld [vmem:[#allocation6 + $0x8] sm:$0xff]
    %v60 = vld [vmem:[#allocation6 + $0x10] sm:$0xff]
    %v61 = vld [vmem:[#allocation6 + $0x18] sm:$0xff]
    %vm62 = vcmask 261120
    %v64 = vsel %vm62, %v56, 0
    %v67 = vsel %vm62, %v57, 0
    %69 = vmatpush.msra.mxu0 0.0
    %70 = vmatpush.msra.mxu0 0.0
    %71 = vmatpush.msra.mxu0 0.0
    %72 = vmatpush.msra.mxu0 0.0
    %73 = vmatpush.msra.mxu0 0.0
    %74 = vmatpush.msra.mxu0 0.0
    %75 = vmatpush.msra.mxu0 0.0
    %76 = vmatpush.msra.mxu0 0.0
    %77 = vmatpush.msra.mxu0 0.0
    %78 = vmatpush.msra.mxu0 0.0
    %79 = vmatpush.msra.mxu0 0.0
    %80 = vmatpush.msra.mxu0 0.0
    %81 = vmatpush.msra.mxu0 %v61
    %82 = vmatpush.msra.mxu0 %v60
    %83 = vmatpush.msra.mxu0 %v59
    %84 = vmatpush.msra.mxu0 %v58
    %85 = vmatmul.f32.gmra.mxu0 %v64
    %v86 = vpop.f32.mrf.mxu0
    %v87 = vadd.f32 0.0, %v86
    %88 = vmatmul.f32.gmra.mxu0 %v67
    %v89 = vpop.f32.mrf.mxu0
    %v90 = vadd.f32 0.0, %v89
    %91 = vdwg.mxu0
    %v92 = vadd.f32 %v54, %v87
    %v93 = vadd.f32 %v55, %v90
    %vm94 = vcmask 785408
    %95 = vst.msk [vmem:[#allocation2] sm:$0xff] %vm94, %v92
    %96 = vst.msk [vmem:[#allocation2 + $0x8] sm:$0xff] %vm94, %v93
    // Predicated region
    $region26: #{tpu_custom_call.1} parent=1 // pred_check
      %p97 = pneg %p47
    $region27: #{tpu_custom_call.1} parent=1 // pred_check_branch
      %99 = sbr.rel (%p97) target = $region29
    $region28: #{tpu_custom_call.1} parent=1 // pred_region
      %v100 = vld [vmem:[#allocation2] sm:$0xff]
      %v101 = vld [vmem:[#allocation2 + $0x8] sm:$0xff]
      %v102 = vld [vmem:[%s2] sm:$0x1]
      %v104 = vperm.slane %v102, 0
      %v106 = vadd.f32 %v100, %v104
      %v107 = vadd.f32 %v101, %v104
      %108 = vst.msk [vmem:[#allocation8] sm:$0xff] %vm94, %v106
      %109 = vst.msk [vmem:[#allocation8 + $0x8] sm:$0xff] %vm94, %v107
    $region29: #{tpu_custom_call.1} parent=1 // pred_fallthru
      _
    // Predicated region
    $region30: #{tpu_custom_call.1} parent=1 // pred_check
      _
    $region31: #{tpu_custom_call.1} parent=1 // pred_check_branch
      %111 = sbr.rel (0) target = $region33
    $region32: #{tpu_custom_call.1} parent=1 // pred_region
      %113 = vsyncadd [#allocation5], 0
      %s114 = sshll.u32 [#allocation8], 4
      %s115 = int_to_ptr.vmem [resolvable:$true] %s114
      %s116 = sshll.u32 %s3, 4
      %s117 = int_to_ptr.hbm [resolvable:$true] %s116
      %122 = dma.vmem_to_hbm [thread:$0]  %s115, 256, %s117, [#allocation5], 128, 128, 8
    $region33: #{tpu_custom_call.1} parent=1 // pred_fallthru
      _
    // Predicated region
    $region34: #{tpu_custom_call.1} parent=1 // pred_check
      _
    $region35: #{tpu_custom_call.1} parent=1 // pred_check_branch
      %124 = sbr.rel (0) target = $region37
    $region36: #{tpu_custom_call.1} parent=1 // pred_region
      %126 = dma.done [#allocation5], 256
    $region37: #{tpu_custom_call.1} parent=1 // pred_fallthru
      _
    %127 = vsyncpa [#allocation4], 1
    %128 = vsyncpa [#allocation7], 1
    %129 = vsyncpa [#allocation5], 1

</llo_original>
